<compile_context>
chip_gen: v7x
topology: tpu7x:2x2x1
jax: 0.10.0
libtpu: 0.0.40
codegen_flags: <defaults>
</compile_context>

<pallas_src>
import jax
import jax.numpy as jnp
from jax.experimental import pallas as pl
from jax.experimental.pallas import tpu as pltpu

NEG_INF = -1e10


def actor_forward_kernel(x_ref, avail_ref, wt_ref, bt_ref, eye_ref,
                         act_ref, logp_ref):
    # Cast streamed inputs in-kernel (no wrapper-side HBM round trips).
    xb = x_ref[...].astype(jnp.bfloat16)        # (TB, OBS)
    ab = avail_ref[...].astype(jnp.bfloat16)    # (TB, A)  ({0,1} exact in bf16)

    # Fused out_enc+action_out, computed directly transposed:
    #   logits_t[a, b] = sum_k Wt[a, k] * x[b, k]      (A, TB), NT matmul, f32 acc.
    logits = jax.lax.dot_general(
        wt_ref[...], xb, (((1,), (1,)), ((), ())),
        preferred_element_type=jnp.float32) + bt_ref[...]          # (A, TB) + (A, 1)

    # Transpose avail on the MXU with a tiny identity matmul (keeps batch on
    # lanes, avoids an XLU transpose / narrow-column layouts).
    avail_t = jax.lax.dot_general(
        eye_ref[...], ab, (((1,), (1,)), ((), ())),
        preferred_element_type=jnp.float32)                        # (A, TB)

    logits = jnp.where(avail_t > 0.0, logits, NEG_INF)

    # Deterministic action = Categorical mode = first argmax over the action
    # axis (now the sublane axis), so the results are lane-dense (1, TB) rows.
    n_act = logits.shape[0]
    m = jnp.max(logits, axis=0, keepdims=True)                     # (1, TB)
    idx = jax.lax.broadcasted_iota(jnp.int32, logits.shape, 0).astype(jnp.float32)
    action = jnp.min(jnp.where(logits == m, idx, float(n_act)),
                     axis=0, keepdims=True)                        # (1, TB) f32

    # log-prob of the argmax action: log_softmax at the max is exactly -lse.
    lse = jnp.log(jnp.sum(jnp.exp(logits - m), axis=0, keepdims=True))

    act_ref[...] = action.astype(jnp.int32)                        # full-lane store
    logp_ref[...] = -lse                                           # full-lane store


def _pick_tile_b(B, max_tile=2048):
    # Few large tiles (per-step overhead ~0.35us dominates at these shapes),
    # but >=2 grid steps when B is large enough so the "parallel" batch axis
    # can split across both TensorCores on v7x.
    if B <= 256:
        return B
    half = (B + 1) // 2
    tile = ((half + 127) // 128) * 128
    return min(tile, max_tile)


def actor_forward(x, w1, b1, w2, b2, avail, *, max_tile_b=2048):
    """x: (B, obs) f32, w1: (obs, H), b1: (1, H), w2: (H, A), b2: (1, A),
    avail: (B, A) f32 (>0 means available).
    Returns: actions (B, 1) int32, action_log_probs (B, 1) f32."""
    B, obs = x.shape
    n_act = w2.shape[1]

    # Fuse the two bias-only Linears (exact: no nonlinearity between out_enc
    # and the ACTLayer head in the module).  Tiny one-time parameter prep.
    wf = jnp.dot(w1, w2)                                    # (obs, A) f32
    wt = wf.T.astype(jnp.bfloat16)                          # (A, obs) bf16, MXU lhs
    bt = (jnp.dot(b1, w2) + b2).reshape(n_act, 1)           # (A, 1) f32 column bias
    eye = jnp.eye(n_act, dtype=jnp.bfloat16)                # (A, A) MXU transposer

    tile_b = _pick_tile_b(B, max_tile_b)
    grid_b = pl.cdiv(B, tile_b)

    cost = pl.CostEstimate(
        flops=2 * B * n_act * (obs + n_act),
        transcendentals=B * (n_act + 1),
        bytes_accessed=(x.size * 4 + avail.size * 4 + wt.size * 2
                        + bt.size * 4 + eye.size * 2 + 2 * B * 4),
    )

    actions_row, logp_row = pl.pallas_call(
        actor_forward_kernel,
        out_shape=(jax.ShapeDtypeStruct((1, B), jnp.int32),
                   jax.ShapeDtypeStruct((1, B), jnp.float32)),
        grid=(grid_b,),
        in_specs=[
            pl.BlockSpec((tile_b, obs), lambda i: (i, 0)),      # x      (streamed)
            pl.BlockSpec((tile_b, n_act), lambda i: (i, 0)),    # avail  (streamed)
            pl.BlockSpec((n_act, obs), lambda i: (0, 0)),       # Wt     (resident)
            pl.BlockSpec((n_act, 1), lambda i: (0, 0)),         # bias   (resident)
            pl.BlockSpec((n_act, n_act), lambda i: (0, 0)),     # eye    (resident)
        ],
        out_specs=(pl.BlockSpec((1, tile_b), lambda i: (0, i)),
                   pl.BlockSpec((1, tile_b), lambda i: (0, i))),
        compiler_params=pltpu.CompilerParams(
            dimension_semantics=("parallel",)),
        cost_estimate=cost,
    )(x, avail, wt, bt, eye)

    # (1, B) -> (B, 1): same contiguous element order, free metadata reshape.
    return actions_row.reshape(B, 1), logp_row.reshape(B, 1)


def actor_forward_ref_fused_bf16(x, w1, b1, w2, b2, avail):
    """Same-arithmetic reference: fused weights, bf16 matmul, f32 accumulation."""
    wf = jnp.dot(w1, w2).astype(jnp.bfloat16)
    bf = jnp.dot(b1, w2) + b2
    logits = jnp.dot(x.astype(jnp.bfloat16), wf,
                     preferred_element_type=jnp.float32) + bf
    logits = jnp.where(avail > 0.0, logits, NEG_INF)
    action = jnp.argmax(logits, axis=-1, keepdims=True).astype(jnp.int32)
    logp = jnp.take_along_axis(jax.nn.log_softmax(logits, axis=-1), action, axis=-1)
    return action, logp


def actor_forward_ref_f32(x, w1, b1, w2, b2, avail):
    """Module-faithful f32 reference: out_enc Linear -> ACTLayer Linear -> mask -> mode."""
    h = jnp.dot(x, w1) + b1
    logits = jnp.dot(h, w2) + b2
    logits = jnp.where(avail > 0.0, logits, NEG_INF)
    action = jnp.argmax(logits, axis=-1, keepdims=True).astype(jnp.int32)
    logp = jnp.take_along_axis(jax.nn.log_softmax(logits, axis=-1), action, axis=-1)
    return action, logp


if __name__ == "__main__":
    # Shapes implied by the module: train_share_observation_shape=(obs_dim,),
    # hidden_size, discrete n_actions.  Batch chosen to exercise a 2-step
    # "parallel" grid (2 tiles of 256) while staying small (512 x 32 f32 = 64 KiB).
    B, OBS, HID, ACT = 512, 32, 64, 16

    key = jax.random.PRNGKey(0)
    k_x, k_w1, k_w2, k_av = jax.random.split(key, 4)

    x = jax.random.normal(k_x, (B, OBS), dtype=jnp.float32)

    # Deterministic synthetic parameters (stand-ins for orthogonal init,
    # biases zero as in the module's constant_(x, 0) init).
    w1 = jax.random.normal(k_w1, (OBS, HID), dtype=jnp.float32) * 0.1   # out_enc
    b1 = jnp.zeros((1, HID), dtype=jnp.float32)
    w2 = jax.random.normal(k_w2, (HID, ACT), dtype=jnp.float32) * 0.1   # ACTLayer head
    b2 = jnp.zeros((1, ACT), dtype=jnp.float32)

    # available_actions mask; guarantee at least one available action per row.
    avail = (jax.random.uniform(k_av, (B, ACT)) > 0.3).astype(jnp.float32)
    avail = avail.at[:, 0].set(1.0)

    actions, logp = actor_forward(x, w1, b1, w2, b2, avail)
    jax.block_until_ready((actions, logp))

    assert actions.shape == (B, 1) and actions.dtype == jnp.int32
    assert logp.shape == (B, 1) and logp.dtype == jnp.float32

    # Tight check vs. a same-arithmetic (fused bf16) reference: validates the
    # Pallas plumbing / masking / argmax / logsumexp exactly.
    ref_a, ref_lp = actor_forward_ref_fused_bf16(x, w1, b1, w2, b2, avail)
    match_frac = float(jnp.mean((actions == ref_a).astype(jnp.float32)))
    assert match_frac >= 0.998, f"action match fraction too low: {match_frac}"
    assert bool(jnp.allclose(logp, ref_lp, atol=1e-3, rtol=1e-3))

    # Loose sanity check vs. the module-faithful f32 two-Linear reference
    # (differences are bf16 matmul rounding only; logp is tie-insensitive).
    f32_a, f32_lp = actor_forward_ref_f32(x, w1, b1, w2, b2, avail)
    assert bool(jnp.allclose(logp, f32_lp, atol=5e-2, rtol=5e-2))

    print("KERNEL_OK")
</pallas_src>

<mosaic_0001>
module attributes {stable_mosaic.version = 11 : i64} {
  func.func @actor_forward_kernel(%arg0: i32, %arg1: memref<256x32xf32, #tpu.memory_space<vmem>>, %arg2: memref<256x16xf32, #tpu.memory_space<vmem>>, %arg3: memref<16x32xbf16, #tpu.memory_space<vmem>>, %arg4: memref<16x1xf32, #tpu.memory_space<vmem>>, %arg5: memref<16x16xbf16, #tpu.memory_space<vmem>>, %arg6: memref<1x256xi32, #tpu.memory_space<vmem>>, %arg7: memref<1x256xf32, #tpu.memory_space<vmem>>) attributes {dimension_semantics = [#tpu.dimension_semantics<parallel>], iteration_bounds = array<i64: 2>, scalar_prefetch = 0 : i64, scratch_operands = 0 : i64, tpu.core_type = #tpu.core_type<tc>, window_params = [{transform_indices = @transform_0, window_bounds = array<i64: 256, 32>}, {transform_indices = @transform_1, window_bounds = array<i64: 256, 16>}, {pipeline_mode = #tpu.pipeline_mode<synchronous>, transform_indices = @transform_2, window_bounds = array<i64: 16, 32>}, {pipeline_mode = #tpu.pipeline_mode<synchronous>, transform_indices = @transform_3, window_bounds = array<i64: 16, 1>}, {pipeline_mode = #tpu.pipeline_mode<synchronous>, transform_indices = @transform_4, window_bounds = array<i64: 16, 16>}, {transform_indices = @transform_5, window_bounds = array<i64: 1, 256>}, {transform_indices = @transform_6, window_bounds = array<i64: 1, 256>}]} {
    %c0 = arith.constant 0 : index
    %c0_0 = arith.constant 0 : index
    %0 = vector.load %arg1[%c0, %c0_0] : memref<256x32xf32, #tpu.memory_space<vmem>>, vector<256x32xf32>
    %1 = arith.truncf %0 : vector<256x32xf32> to vector<256x32xbf16>
    %c0_1 = arith.constant 0 : index
    %c0_2 = arith.constant 0 : index
    %2 = vector.load %arg2[%c0_1, %c0_2] : memref<256x16xf32, #tpu.memory_space<vmem>>, vector<256x16xf32>
    %3 = arith.truncf %2 : vector<256x16xf32> to vector<256x16xbf16>
    %c0_3 = arith.constant 0 : index
    %c0_4 = arith.constant 0 : index
    %4 = vector.load %arg3[%c0_3, %c0_4] : memref<16x32xbf16, #tpu.memory_space<vmem>>, vector<16x32xbf16>
    %cst = arith.constant dense<0.000000e+00> : vector<16x256xf32>
    %5 = tpu.matmul %4, %1, %cst {dimension_numbers = #tpu.dot_dimension_numbers<[1], [1], [0], [0], [0, 0, 1, 0], [], []>} : vector<16x32xbf16>, vector<256x32xbf16>, vector<16x256xf32> -> vector<16x256xf32>
    %c0_5 = arith.constant 0 : index
    %c0_6 = arith.constant 0 : index
    %6 = vector.load %arg4[%c0_5, %c0_6] : memref<16x1xf32, #tpu.memory_space<vmem>>, vector<16x1xf32>
    %7 = vector.broadcast %6 : vector<16x1xf32> to vector<16x256xf32>
    %8 = arith.addf %5, %7 : vector<16x256xf32>
    %c0_7 = arith.constant 0 : index
    %c0_8 = arith.constant 0 : index
    %9 = vector.load %arg5[%c0_7, %c0_8] : memref<16x16xbf16, #tpu.memory_space<vmem>>, vector<16x16xbf16>
    %cst_9 = arith.constant dense<0.000000e+00> : vector<16x256xf32>
    %10 = tpu.matmul %9, %3, %cst_9 {dimension_numbers = #tpu.dot_dimension_numbers<[1], [1], [0], [0], [0, 0, 1, 0], [], []>} : vector<16x16xbf16>, vector<256x16xbf16>, vector<16x256xf32> -> vector<16x256xf32>
    %cst_10 = arith.constant 0.000000e+00 : f32
    %11 = vector.broadcast %cst_10 : f32 to vector<16x256xf32>
    %12 = arith.cmpf ogt, %10, %11 : vector<16x256xf32>
    %cst_11 = arith.constant -1.000000e+10 : f32
    %13 = vector.broadcast %cst_11 : f32 to vector<16x256xf32>
    %14 = arith.select %12, %8, %13 : vector<16x256xi1>, vector<16x256xf32>
    %cst_12 = arith.constant dense<0xFF800000> : vector<256xf32>
    %15 = vector.multi_reduction <maximumf>, %14, %cst_12 [0] : vector<16x256xf32> to vector<256xf32>
    %16 = vector.shape_cast %15 : vector<256xf32> to vector<1x256xf32>
    %17 = tpu.iota {dimensions = array<i32: 0>} : vector<16x256xi32>
    %18 = arith.sitofp %17 : vector<16x256xi32> to vector<16x256xf32>
    %19 = vector.broadcast %16 : vector<1x256xf32> to vector<16x256xf32>
    %20 = arith.cmpf oeq, %14, %19 : vector<16x256xf32>
    %cst_13 = arith.constant 1.600000e+01 : f32
    %21 = vector.broadcast %cst_13 : f32 to vector<16x256xf32>
    %22 = arith.select %20, %18, %21 : vector<16x256xi1>, vector<16x256xf32>
    %cst_14 = arith.constant dense<0x7F800000> : vector<256xf32>
    %23 = vector.multi_reduction <minimumf>, %22, %cst_14 [0] : vector<16x256xf32> to vector<256xf32>
    %24 = vector.shape_cast %23 : vector<256xf32> to vector<1x256xf32>
    %25 = vector.broadcast %16 : vector<1x256xf32> to vector<16x256xf32>
    %26 = arith.subf %14, %25 : vector<16x256xf32>
    %27 = math.exp %26 : vector<16x256xf32>
    %cst_15 = arith.constant dense<0.000000e+00> : vector<256xf32>
    %28 = vector.multi_reduction <add>, %27, %cst_15 [0] : vector<16x256xf32> to vector<256xf32>
    %29 = vector.shape_cast %28 : vector<256xf32> to vector<1x256xf32>
    %30 = math.log %29 : vector<1x256xf32>
    %31 = arith.fptosi %24 : vector<1x256xf32> to vector<1x256xi32>
    %c0_16 = arith.constant 0 : index
    %c0_17 = arith.constant 0 : index
    %32 = vector.load %arg6[%c0_16, %c0_17] : memref<1x256xi32, #tpu.memory_space<vmem>>, vector<1x256xi32>
    tpu.vector_store %arg6[%c0_16, %c0_17], %31 {strides = array<i32>} : memref<1x256xi32, #tpu.memory_space<vmem>>, vector<1x256xi32>,
    %cst_18 = arith.constant 0.000000e+00 : f32
    %33 = vector.broadcast %cst_18 : f32 to vector<1x256xf32>
    %34 = arith.subf %33, %30 : vector<1x256xf32>
    %c0_19 = arith.constant 0 : index
    %c0_20 = arith.constant 0 : index
    %35 = vector.load %arg7[%c0_19, %c0_20] : memref<1x256xf32, #tpu.memory_space<vmem>>, vector<1x256xf32>
    tpu.vector_store %arg7[%c0_19, %c0_20], %34 {strides = array<i32>} : memref<1x256xf32, #tpu.memory_space<vmem>>, vector<1x256xf32>,
    return
  }
  func.func @transform_0(%arg0: i32) -> (i32, i32) {
    %c0_i32 = arith.constant 0 : i32
    %c0_i32_0 = arith.constant 0 : i32
    return %arg0, %c0_i32 : i32, i32
  }
  func.func @transform_1(%arg0: i32) -> (i32, i32) {
    %c0_i32 = arith.constant 0 : i32
    %c0_i32_0 = arith.constant 0 : i32
    return %arg0, %c0_i32 : i32, i32
  }
  func.func @transform_2(%arg0: i32) -> (i32, i32) {
    %c0_i32 = arith.constant 0 : i32
    %c0_i32_0 = arith.constant 0 : i32
    %c0_i32_1 = arith.constant 0 : i32
    return %c0_i32, %c0_i32_0 : i32, i32
  }
  func.func @transform_3(%arg0: i32) -> (i32, i32) {
    %c0_i32 = arith.constant 0 : i32
    %c0_i32_0 = arith.constant 0 : i32
    %c0_i32_1 = arith.constant 0 : i32
    return %c0_i32, %c0_i32_0 : i32, i32
  }
  func.func @transform_4(%arg0: i32) -> (i32, i32) {
    %c0_i32 = arith.constant 0 : i32
    %c0_i32_0 = arith.constant 0 : i32
    %c0_i32_1 = arith.constant 0 : i32
    return %c0_i32, %c0_i32_0 : i32, i32
  }
  func.func @transform_5(%arg0: i32) -> (i32, i32) {
    %c0_i32 = arith.constant 0 : i32
    %c0_i32_0 = arith.constant 0 : i32
    return %c0_i32, %arg0 : i32, i32
  }
  func.func @transform_6(%arg0: i32) -> (i32, i32) {
    %c0_i32 = arith.constant 0 : i32
    %c0_i32_0 = arith.constant 0 : i32
    return %c0_i32, %arg0 : i32, i32
  }
}

</mosaic_0001>

<llo_original>
// kernel: tpu_custom_call.1
$region0: #{tpu_custom_call.1}
  #allocation0 [shape = 'u32[]', space=smem, size = 0x4, offset = 0x4, fixed_abs, tag = 'smem constant byte address 0x4 - core index']
  #allocation1 [shape = 'u32[144,128]{1,0:T(1,128)}', space=vmem, size = 0x12000, scoped, tag = 'internal scratch']
  %s0 = inlined_call_operand.vmem [shape: f32[512,32], index: 0, kind: input, shape index: {}]
  %s1 = inlined_call_operand.vmem [shape: f32[512,16], index: 1, kind: input, shape index: {}]
  %s2 = inlined_call_operand.vmem [shape: bf16[16,32], index: 2, kind: input, shape index: {}]
  %s3 = inlined_call_operand.vmem [shape: f32[16,1], index: 3, kind: input, shape index: {}]
  %s4 = inlined_call_operand.vmem [shape: bf16[16,16], index: 4, kind: input, shape index: {}]
  %s5 = inlined_call_operand.hbm [shape: s32[1,512], index: 5, kind: output, shape index: {0}]
  %s6 = inlined_call_operand.hbm [shape: f32[1,512], index: 6, kind: output, shape index: {1}]
  %7 = xla_tuple %s5, %s6
  %s8 = sld [smem:[#allocation0]]
  $region61: #{tpu_custom_call.1} parent=0
    _
  %s10 = ssub.s32 1, %s8
  %s11 = scalar_select 0, %s10, %s8
  $region1: #{tpu_custom_call.1} parent=0
    #allocation2 [shape = 'u8[2048]{0}', space=vmem, size = 0x800, scoped, tag = 'output window, operand 0']
    #allocation3 [shape = 's32[2]{0}', space=sflag, size = 0x8, scoped, tag = 'scoped memory for tpu_custom_call.1']
    #allocation4 [shape = 'u8[2048]{0}', space=vmem, size = 0x800, scoped, tag = 'output window, operand 1']
    #allocation5 [shape = 's32[2]{0}', space=sflag, size = 0x8, scoped, tag = 'scoped memory for tpu_custom_call.1']
    %12 = vsyncpa [#allocation3], 0
    %s13 = scalar_lea.sflag [#allocation3], 1
    %14 = vsyncpa %s13, 0
    %15 = vsyncpa [#allocation5], 0
    %s16 = scalar_lea.sflag [#allocation5], 1
    %17 = vsyncpa %s16, 0
    loop: start=0, step=1, limit=4
    $region2: #{tpu_custom_call.1} parent=1 // loop_pre_header
      _
    $region3: #{tpu_custom_call.1} parent=1 // loop_header
      %s19 = sphi 0, %s23
      %p20 = scmp.ge.s32.totalorder %s19, 4
      %s29 = sphi 0, %s31
      %s32 = sphi 0, %s29
      %s33 = sphi 0, %s32
      %s49 = sphi 0, %s33
      %s55 = sphi 0, %s57
      %s58 = sphi 0, %s55
      %s59 = sphi 0, %s58
      %s75 = sphi 0, %s59
      %s79 = sphi 0, %s79
      %s81 = sphi 0, %s79
      %s82 = sphi 0, %s81
      %s96 = sphi 0, %s82
      %s100 = sphi 0, %s100
      %s102 = sphi 0, %s100
      %s103 = sphi 0, %s102
      %s117 = sphi 0, %s103
      %s121 = sphi 0, %s121
      %s123 = sphi 0, %s121
      %s124 = sphi 0, %s123
      %s138 = sphi 0, %s124
      %s144 = sphi 0, %s146
      %s147 = sphi 0, %s144
      %s148 = sphi 0, %s147
      %s164 = sphi 0, %s148
      %s170 = sphi 0, %s172
      %s173 = sphi 0, %s170
      %s174 = sphi 0, %s173
      %s190 = sphi 0, %s174
    $region4: #{tpu_custom_call.1} parent=1 // loop_header_branch
      %22 = sbr.rel (%p20) target = $region8
    $region5: #{tpu_custom_call.1} parent=1 // loop_body
      %s24 = ssub.s32 %s19, 1
      %s25 = ssub.s32 %s19, 2
      %s26 = sadd.s32 %s19, 1
      %s27 = ssub.s32 %s19, %s26
      %p28 = scmp.eq.s32.totalorder %s27, 0
      %s30 = sadd.s32 %s29, 1
      %s31 = scalar_select %p28, %s29, %s30
      %p34 = pneg %p28
      %p35 = scmp.eq.s32.totalorder %s19, 1
      %p36 = por %p34, %p35
      %p37 = scmp.ne.s32.totalorder %s29, %s32
      %p38 = scmp.eq.s32.totalorder %s19, 0
      %p39 = por %p37, %p38
      %p40 = scmp.ne.s32.totalorder %s29, %s32
      %p41 = scmp.eq.s32.totalorder %s24, 1
      %p42 = por %p40, %p41
      %p43 = scmp.ne.s32.totalorder %s32, %s33
      %p44 = scmp.eq.s32.totalorder %s24, 0
      %p45 = por %p43, %p44
      %p46 = scmp.ne.s32.totalorder %s32, %s33
      %p47 = scmp.eq.s32.totalorder %s25, 1
      %p48 = por %p46, %p47
      %p50 = scmp.ne.s32.totalorder %s33, %s49
      %p51 = scmp.eq.s32.totalorder %s25, 0
      %p52 = por %p50, %p51
      %s53 = ssub.s32 %s19, %s26
      %p54 = scmp.eq.s32.totalorder %s53, 0
      %s56 = sadd.s32 %s55, 1
      %s57 = scalar_select %p54, %s55, %s56
      %p60 = pneg %p54
      %p61 = scmp.eq.s32.totalorder %s19, 1
      %p62 = por %p60, %p61
      %p63 = scmp.ne.s32.totalorder %s55, %s58
      %p64 = scmp.eq.s32.totalorder %s19, 0
      %p65 = por %p63, %p64
      %p66 = scmp.ne.s32.totalorder %s55, %s58
      %p67 = scmp.eq.s32.totalorder %s24, 1
      %p68 = por %p66, %p67
      %p69 = scmp.ne.s32.totalorder %s58, %s59
      %p70 = scmp.eq.s32.totalorder %s24, 0
      %p71 = por %p69, %p70
      %p72 = scmp.ne.s32.totalorder %s58, %s59
      %p73 = scmp.eq.s32.totalorder %s25, 1
      %p74 = por %p72, %p73
      %p76 = scmp.ne.s32.totalorder %s59, %s75
      %p77 = scmp.eq.s32.totalorder %s25, 0
      %p78 = por %p76, %p77
      %s80 = sadd.s32 %s79, 1
      %p83 = scmp.eq.s32.totalorder %s19, 1
      %p84 = scmp.ne.s32.totalorder %s79, %s81
      %p85 = scmp.eq.s32.totalorder %s19, 0
      %p86 = por %p84, %p85
      %p87 = scmp.ne.s32.totalorder %s79, %s81
      %p88 = scmp.eq.s32.totalorder %s24, 1
      %p89 = por %p87, %p88
      %p90 = scmp.ne.s32.totalorder %s81, %s82
      %p91 = scmp.eq.s32.totalorder %s24, 0
      %p92 = por %p90, %p91
      %p93 = scmp.ne.s32.totalorder %s81, %s82
      %p94 = scmp.eq.s32.totalorder %s25, 1
      %p95 = por %p93, %p94
      %p97 = scmp.ne.s32.totalorder %s82, %s96
      %p98 = scmp.eq.s32.totalorder %s25, 0
      %p99 = por %p97, %p98
      %s101 = sadd.s32 %s100, 1
      %p104 = scmp.eq.s32.totalorder %s19, 1
      %p105 = scmp.ne.s32.totalorder %s100, %s102
      %p106 = scmp.eq.s32.totalorder %s19, 0
      %p107 = por %p105, %p106
      %p108 = scmp.ne.s32.totalorder %s100, %s102
      %p109 = scmp.eq.s32.totalorder %s24, 1
      %p110 = por %p108, %p109
      %p111 = scmp.ne.s32.totalorder %s102, %s103
      %p112 = scmp.eq.s32.totalorder %s24, 0
      %p113 = por %p111, %p112
      %p114 = scmp.ne.s32.totalorder %s102, %s103
      %p115 = scmp.eq.s32.totalorder %s25, 1
      %p116 = por %p114, %p115
      %p118 = scmp.ne.s32.totalorder %s103, %s117
      %p119 = scmp.eq.s32.totalorder %s25, 0
      %p120 = por %p118, %p119
      %s122 = sadd.s32 %s121, 1
      %p125 = scmp.eq.s32.totalorder %s19, 1
      %p126 = scmp.ne.s32.totalorder %s121, %s123
      %p127 = scmp.eq.s32.totalorder %s19, 0
      %p128 = por %p126, %p127
      %p129 = scmp.ne.s32.totalorder %s121, %s123
      %p130 = scmp.eq.s32.totalorder %s24, 1
      %p131 = por %p129, %p130
      %p132 = scmp.ne.s32.totalorder %s123, %s124
      %p133 = scmp.eq.s32.totalorder %s24, 0
      %p134 = por %p132, %p133
      %p135 = scmp.ne.s32.totalorder %s123, %s124
      %p136 = scmp.eq.s32.totalorder %s25, 1
      %p137 = por %p135, %p136
      %p139 = scmp.ne.s32.totalorder %s124, %s138
      %p140 = scmp.eq.s32.totalorder %s25, 0
      %p141 = por %p139, %p140
      %s142 = ssub.s32 %s19, %s26
      %p143 = scmp.eq.s32.totalorder %s142, 0
      %s145 = sadd.s32 %s144, 1
      %s146 = scalar_select %p143, %s144, %s145
      %p149 = pneg %p143
      %p150 = scmp.eq.s32.totalorder %s19, 1
      %p151 = por %p149, %p150
      %p152 = scmp.ne.s32.totalorder %s144, %s147
      %p153 = scmp.eq.s32.totalorder %s19, 0
      %p154 = por %p152, %p153
      %p155 = scmp.ne.s32.totalorder %s144, %s147
      %p156 = scmp.eq.s32.totalorder %s24, 1
      %p157 = por %p155, %p156
      %p158 = scmp.ne.s32.totalorder %s147, %s148
      %p159 = scmp.eq.s32.totalorder %s24, 0
      %p160 = por %p158, %p159
      %p161 = scmp.ne.s32.totalorder %s147, %s148
      %p162 = scmp.eq.s32.totalorder %s25, 1
      %p163 = por %p161, %p162
      %p165 = scmp.ne.s32.totalorder %s148, %s164
      %p166 = scmp.eq.s32.totalorder %s25, 0
      %p167 = por %p165, %p166
      %s168 = ssub.s32 %s19, %s26
      %p169 = scmp.eq.s32.totalorder %s168, 0
      %s171 = sadd.s32 %s170, 1
      %s172 = scalar_select %p169, %s170, %s171
      %p175 = pneg %p169
      %p176 = scmp.eq.s32.totalorder %s19, 1
      %p177 = por %p175, %p176
      %p178 = scmp.ne.s32.totalorder %s170, %s173
      %p179 = scmp.eq.s32.totalorder %s19, 0
      %p180 = por %p178, %p179
      %p181 = scmp.ne.s32.totalorder %s170, %s173
      %p182 = scmp.eq.s32.totalorder %s24, 1
      %p183 = por %p181, %p182
      %p184 = scmp.ne.s32.totalorder %s173, %s174
      %p185 = scmp.eq.s32.totalorder %s24, 0
      %p186 = por %p184, %p185
      %p187 = scmp.ne.s32.totalorder %s173, %s174
      %p188 = scmp.eq.s32.totalorder %s25, 1
      %p189 = por %p187, %p188
      %p191 = scmp.ne.s32.totalorder %s174, %s190
      %p192 = scmp.eq.s32.totalorder %s25, 0
      %p193 = por %p191, %p192
      %p194 = scmp.le.s32.totalorder 1, %s19
      %p195 = scmp.lt.s32.totalorder %s19, 3
      %p196 = pnand %p194, %p195
      %p197 = pneg %p196
      // Predicated region
      $region9: #{tpu_custom_call.1} parent=5 // pred_check
        _
      $region10: #{tpu_custom_call.1} parent=5 // pred_check_branch
        %199 = sbr.rel (%p196) target = $region12
      $region11: #{tpu_custom_call.1} parent=5 // pred_region
        %s200 = ssub.s32 %s19, 1
        // Predicated region
        $region13: #{tpu_custom_call.1} parent=11 // pred_check
          %p201 = pneg %p92
        $region14: #{tpu_custom_call.1} parent=11 // pred_check_branch
          %203 = sbr.rel (%p201) target = $region16
        $region15: #{tpu_custom_call.1} parent=11 // pred_region
          _
        $region16: #{tpu_custom_call.1} parent=11 // pred_fallthru
          _
        // Predicated region
        $region17: #{tpu_custom_call.1} parent=11 // pred_check
          %p204 = pneg %p113
        $region18: #{tpu_custom_call.1} parent=11 // pred_check_branch
          %206 = sbr.rel (%p204) target = $region20
        $region19: #{tpu_custom_call.1} parent=11 // pred_region
          _
        $region20: #{tpu_custom_call.1} parent=11 // pred_fallthru
          _
        // Predicated region
        $region21: #{tpu_custom_call.1} parent=11 // pred_check
          %p207 = pneg %p134
        $region22: #{tpu_custom_call.1} parent=11 // pred_check_branch
          %209 = sbr.rel (%p207) target = $region24
        $region23: #{tpu_custom_call.1} parent=11 // pred_region
          _
        $region24: #{tpu_custom_call.1} parent=11 // pred_fallthru
          _
      $region12: #{tpu_custom_call.1} parent=5 // pred_fallthru
        _
      %p210 = scmp.lt.s32.totalorder %s19, 2
      // Predicated region
      $region25: #{tpu_custom_call.1} parent=5 // pred_check
        %p211 = pneg %p210
      $region26: #{tpu_custom_call.1} parent=5 // pred_check_branch
        %213 = sbr.rel (%p211) target = $region28
      $region27: #{tpu_custom_call.1} parent=5 // pred_region
        // Predicated region
        $region29: #{tpu_custom_call.1} parent=27 // pred_check
          %p214 = pneg %p39
        $region30: #{tpu_custom_call.1} parent=27 // pred_check_branch
          %216 = sbr.rel (%p214) target = $region32
        $region31: #{tpu_custom_call.1} parent=27 // pred_region
          %s217 = smul.u32 32, %s19
          %p218 = scmp.lt.s32.totalorder %s217, 63
          %s219 = scalar_select %p218, %s217, 63
          %s220 = smul.addr %s219, 8
          %s221 = scalar_lea.vmem %s0, %s220
          %s222 = smul.u32 32, %s19
        $region32: #{tpu_custom_call.1} parent=27 // pred_fallthru
          _
        // Predicated region
        $region33: #{tpu_custom_call.1} parent=27 // pred_check
          %p223 = pneg %p65
        $region34: #{tpu_custom_call.1} parent=27 // pred_check_branch
          %225 = sbr.rel (%p223) target = $region36
        $region35: #{tpu_custom_call.1} parent=27 // pred_region
          %s226 = smul.u32 32, %s19
          %p227 = scmp.lt.s32.totalorder %s226, 63
          %s228 = scalar_select %p227, %s226, 63
          %s229 = smul.addr %s228, 8
          %s230 = scalar_lea.vmem %s1, %s229
          %s231 = smul.u32 32, %s19
        $region36: #{tpu_custom_call.1} parent=27 // pred_fallthru
          _
      $region28: #{tpu_custom_call.1} parent=5 // pred_fallthru
        _
      %p232 = scmp.le.s32.totalorder 1, %s19
      %p233 = scmp.lt.s32.totalorder %s19, 3
      %p234 = pnand %p232, %p233
      %p235 = pneg %p234
      // Predicated region
      $region37: #{tpu_custom_call.1} parent=5 // pred_check
        _
      $region38: #{tpu_custom_call.1} parent=5 // pred_check_branch
        %237 = sbr.rel (%p234) target = $region40
      $region39: #{tpu_custom_call.1} parent=5 // pred_region
        %s238 = ssub.s32 %s19, 1
        %s239 = smul.u32 32, %s24
        %p240 = scmp.lt.s32.totalorder %s239, 63
        %s241 = scalar_select %p240, %s239, 63
        %s242 = smul.addr %s241, 8
        %s243 = scalar_lea.vmem %s0, %s242
        %p244 = pneg %p45
        %p245 = pneg %p42
        %s246 = smul.u32 32, %s24
        %p247 = scmp.lt.s32.totalorder %s246, 63
        %s248 = scalar_select %p247, %s246, 63
        %s249 = smul.addr %s248, 8
        %s250 = scalar_lea.vmem %s1, %s249
        %p251 = pneg %p71
        %p252 = pneg %p68
        %p253 = pneg %p92
        %p254 = pneg %p89
        %p255 = pneg %p113
        %p256 = pneg %p110
        %p257 = pneg %p134
        %p258 = pneg %p131
        %p259 = pneg %p160
        %p260 = pneg %p157
        %s261 = sand.u32 %s147, 1
        %s262 = scalar_lea.sflag [#allocation3], %s261
        %s263 = sand.u32 %s147, 1
        %s264 = smul.addr %s263, 2
        %s265 = scalar_lea.vmem [#allocation2], %s264
        %p266 = pneg %p186
        %p267 = pneg %p183
        %s268 = sand.u32 %s173, 1
        %s269 = scalar_lea.sflag [#allocation5], %s268
        %s270 = sand.u32 %s173, 1
        %s271 = smul.addr %s270, 2
        %s272 = scalar_lea.vmem [#allocation4], %s271
        %s273 = smul.u32 32, %s24
        %p274 = scmp.lt.s32.totalorder %s273, 63
        %s275 = scalar_select %p274, %s273, 63
        %s276 = smul.addr %s275, 8
        %s277 = scalar_lea.vmem %s0, %s276
        %s278 = smul.u32 32, %s24
        %s279 = smul.u32 32, %s24
        %p280 = scmp.lt.s32.totalorder %s279, 63
        %s281 = scalar_select %p280, %s279, 63
        %s282 = smul.addr %s281, 8
        %s283 = scalar_lea.vmem %s1, %s282
        %s284 = smul.u32 32, %s24
        %s285 = smul.u32 2, %s24
        %s286 = smul.u32 2, %s24
        %v288 = vld [vmem:[%s277] sm:$0xff]
        %v289 = vld [vmem:[%s277 + $0x8] sm:$0xff]
        %v290 = vld [vmem:[%s277 + $0x10] sm:$0xff]
        %v291 = vld [vmem:[%s277 + $0x18] sm:$0xff]
        %v292 = vld [vmem:[%s277 + $0x20] sm:$0xff]
        %v293 = vld [vmem:[%s277 + $0x28] sm:$0xff]
        %v294 = vld [vmem:[%s277 + $0x30] sm:$0xff]
        %v295 = vld [vmem:[%s277 + $0x38] sm:$0xff]
        %v296 = vld [vmem:[%s277 + $0x40] sm:$0xff]
        %v297 = vld [vmem:[%s277 + $0x48] sm:$0xff]
        %v298 = vld [vmem:[%s277 + $0x50] sm:$0xff]
        %v299 = vld [vmem:[%s277 + $0x58] sm:$0xff]
        %v300 = vld [vmem:[%s277 + $0x60] sm:$0xff]
        %v301 = vld [vmem:[%s277 + $0x68] sm:$0xff]
        %v302 = vld [vmem:[%s277 + $0x70] sm:$0xff]
        %v303 = vld [vmem:[%s277 + $0x78] sm:$0xff]
        %v304 = vld [vmem:[%s277 + $0x80] sm:$0xff]
        %v305 = vld [vmem:[%s277 + $0x88] sm:$0xff]
        %v306 = vld [vmem:[%s277 + $0x90] sm:$0xff]
        %v307 = vld [vmem:[%s277 + $0x98] sm:$0xff]
        %v308 = vld [vmem:[%s277 + $0xa0] sm:$0xff]
        %v309 = vld [vmem:[%s277 + $0xa8] sm:$0xff]
        %v310 = vld [vmem:[%s277 + $0xb0] sm:$0xff]
        %v311 = vld [vmem:[%s277 + $0xb8] sm:$0xff]
        %v312 = vld [vmem:[%s277 + $0xc0] sm:$0xff]
        %v313 = vld [vmem:[%s277 + $0xc8] sm:$0xff]
        %v314 = vld [vmem:[%s277 + $0xd0] sm:$0xff]
        %v315 = vld [vmem:[%s277 + $0xd8] sm:$0xff]
        %v316 = vld [vmem:[%s277 + $0xe0] sm:$0xff]
        %v317 = vld [vmem:[%s277 + $0xe8] sm:$0xff]
        %v318 = vld [vmem:[%s277 + $0xf0] sm:$0xff]
        %v319 = vld [vmem:[%s277 + $0xf8] sm:$0xff]
        %v320 = vpack.c.bf16 %v289, %v288
        %v321 = vpack.c.bf16 %v291, %v290
        %v322 = vpack.c.bf16 %v293, %v292
        %v323 = vpack.c.bf16 %v295, %v294
        %v324 = vpack.c.bf16 %v297, %v296
        %v325 = vpack.c.bf16 %v299, %v298
        %v326 = vpack.c.bf16 %v301, %v300
        %v327 = vpack.c.bf16 %v303, %v302
        %v328 = vpack.c.bf16 %v305, %v304
        %v329 = vpack.c.bf16 %v307, %v306
        %v330 = vpack.c.bf16 %v309, %v308
        %v331 = vpack.c.bf16 %v311, %v310
        %v332 = vpack.c.bf16 %v313, %v312
        %v333 = vpack.c.bf16 %v315, %v314
        %v334 = vpack.c.bf16 %v317, %v316
        %v335 = vpack.c.bf16 %v319, %v318
        %v336 = vld [vmem:[%s283] sm:$0xff]
        %v337 = vld [vmem:[%s283 + $0x8] sm:$0xff]
        %v338 = vld [vmem:[%s283 + $0x10] sm:$0xff]
        %v339 = vld [vmem:[%s283 + $0x18] sm:$0xff]
        %v340 = vld [vmem:[%s283 + $0x20] sm:$0xff]
        %v341 = vld [vmem:[%s283 + $0x28] sm:$0xff]
        %v342 = vld [vmem:[%s283 + $0x30] sm:$0xff]
        %v343 = vld [vmem:[%s283 + $0x38] sm:$0xff]
        %v344 = vld [vmem:[%s283 + $0x40] sm:$0xff]
        %v345 = vld [vmem:[%s283 + $0x48] sm:$0xff]
        %v346 = vld [vmem:[%s283 + $0x50] sm:$0xff]
        %v347 = vld [vmem:[%s283 + $0x58] sm:$0xff]
        %v348 = vld [vmem:[%s283 + $0x60] sm:$0xff]
        %v349 = vld [vmem:[%s283 + $0x68] sm:$0xff]
        %v350 = vld [vmem:[%s283 + $0x70] sm:$0xff]
        %v351 = vld [vmem:[%s283 + $0x78] sm:$0xff]
        %v352 = vld [vmem:[%s283 + $0x80] sm:$0xff]
        %v353 = vld [vmem:[%s283 + $0x88] sm:$0xff]
        %v354 = vld [vmem:[%s283 + $0x90] sm:$0xff]
        %v355 = vld [vmem:[%s283 + $0x98] sm:$0xff]
        %v356 = vld [vmem:[%s283 + $0xa0] sm:$0xff]
        %v357 = vld [vmem:[%s283 + $0xa8] sm:$0xff]
        %v358 = vld [vmem:[%s283 + $0xb0] sm:$0xff]
        %v359 = vld [vmem:[%s283 + $0xb8] sm:$0xff]
        %v360 = vld [vmem:[%s283 + $0xc0] sm:$0xff]
        %v361 = vld [vmem:[%s283 + $0xc8] sm:$0xff]
        %v362 = vld [vmem:[%s283 + $0xd0] sm:$0xff]
        %v363 = vld [vmem:[%s283 + $0xd8] sm:$0xff]
        %v364 = vld [vmem:[%s283 + $0xe0] sm:$0xff]
        %v365 = vld [vmem:[%s283 + $0xe8] sm:$0xff]
        %v366 = vld [vmem:[%s283 + $0xf0] sm:$0xff]
        %v367 = vld [vmem:[%s283 + $0xf8] sm:$0xff]
        %v368 = vpack.c.bf16 %v337, %v336
        %v369 = vpack.c.bf16 %v339, %v338
        %v370 = vpack.c.bf16 %v341, %v340
        %v371 = vpack.c.bf16 %v343, %v342
        %v372 = vpack.c.bf16 %v345, %v344
        %v373 = vpack.c.bf16 %v347, %v346
        %v374 = vpack.c.bf16 %v349, %v348
        %v375 = vpack.c.bf16 %v351, %v350
        %v376 = vpack.c.bf16 %v353, %v352
        %v377 = vpack.c.bf16 %v355, %v354
        %v378 = vpack.c.bf16 %v357, %v356
        %v379 = vpack.c.bf16 %v359, %v358
        %v380 = vpack.c.bf16 %v361, %v360
        %v381 = vpack.c.bf16 %v363, %v362
        %v382 = vpack.c.bf16 %v365, %v364
        %v383 = vpack.c.bf16 %v367, %v366
        %v384 = vld [vmem:[%s2] sm:$0xf]
        %v385 = vld [vmem:[%s2 + $0x4] sm:$0xf]
        %v386 = vld [vmem:[%s3] sm:$0xff]
        %v387 = vld [vmem:[%s3 + $0x8] sm:$0xff]
        %389 = vset.pattern.permute.xlu0 0
        %390 = vperm.xlu0 %389, %v386
        %v391 = vpop.permute.xlu0 %390
        %394 = vset.pattern.permute.xlu0 0
        %395 = vperm.xlu0 %394, %v387
        %v396 = vpop.permute.xlu0 %395
        %v400 = vunpack.c.l.b16 %v384
        %v401 = vunpack.c.l.b16 %v385
        %v402 = vpack.c.b16 %v401, %v400
        %vm403 = vcmask 261120
        %v405 = vsel %vm403, %v402, 0
        %v408 = vsel %vm403, %v320, 0
        %v411 = vsel %vm403, %v321, 0
        %v414 = vsel %vm403, %v322, 0
        %v417 = vsel %vm403, %v323, 0
        %v420 = vsel %vm403, %v324, 0
        %v423 = vsel %vm403, %v325, 0
        %v426 = vsel %vm403, %v326, 0
        %v429 = vsel %vm403, %v327, 0
        %v432 = vsel %vm403, %v328, 0
        %v435 = vsel %vm403, %v329, 0
        %v438 = vsel %vm403, %v330, 0
        %v441 = vsel %vm403, %v331, 0
        %v444 = vsel %vm403, %v332, 0
        %v447 = vsel %vm403, %v333, 0
        %v450 = vsel %vm403, %v334, 0
        %v453 = vsel %vm403, %v335, 0
        %455 = vmatprep.subr.bf16.mxu0 0
        %456 = vmatpush1.bf16.xpose.msra.mxu0 %v408
        %457 = vmatprep.subr.bf16.mxu0 0
        %458 = vmatpush1.bf16.xpose.msra.mxu0 %v411
        %459 = vmatprep.subr.bf16.mxu0 0
        %460 = vmatpush1.bf16.xpose.msra.mxu0 %v414
        %461 = vmatprep.subr.bf16.mxu0 0
        %462 = vmatpush1.bf16.xpose.msra.mxu0 %v417
        %463 = vmatprep.subr.bf16.mxu0 0
        %464 = vmatpush1.bf16.xpose.msra.mxu0 %v420
        %465 = vmatprep.subr.bf16.mxu0 0
        %466 = vmatpush1.bf16.xpose.msra.mxu0 %v423
        %467 = vmatprep.subr.bf16.mxu0 0
        %468 = vmatpush1.bf16.xpose.msra.mxu0 %v426
        %469 = vmatprep.subr.bf16.mxu0 0
        %470 = vmatpush1.bf16.xpose.msra.mxu0 %v429
        %471 = vmatprep.subr.bf16.mxu0 0
        %472 = vmatpush1.bf16.xpose.msra.mxu0 %v432
        %473 = vmatprep.subr.bf16.mxu0 0
        %474 = vmatpush1.bf16.xpose.msra.mxu0 %v435
        %475 = vmatprep.subr.bf16.mxu0 0
        %476 = vmatpush1.bf16.xpose.msra.mxu0 %v438
        %477 = vmatprep.subr.bf16.mxu0 0
        %478 = vmatpush1.bf16.xpose.msra.mxu0 %v441
        %479 = vmatprep.subr.bf16.mxu0 0
        %480 = vmatpush1.bf16.xpose.msra.mxu0 %v444
        %481 = vmatprep.subr.bf16.mxu0 0
        %482 = vmatpush1.bf16.xpose.msra.mxu0 %v447
        %483 = vmatprep.subr.bf16.mxu0 0
        %484 = vmatpush1.bf16.xpose.msra.mxu0 %v450
        %485 = vmatprep.subr.bf16.mxu0 0
        %486 = vmatpush1.bf16.xpose.msra.mxu0 %v453
        %487 = vmatprep.mubr.bf16.mxu0 0
        %488 = vmatmul.mubr.bf16.gmra.mrb[0].mxu0 %v405
        %v489 = vpop.f32.mrb[0].mxu0
        %v490 = vadd.f32 %v391, %v489
        %v491 = vpop.f32.mrb[0].mxu0
        %v492 = vadd.f32 %v391, %v491
        %v493 = vpop.f32.mrb[0].mxu0
        %v494 = vadd.f32 %v396, %v493
        %v495 = vpop.f32.mrb[0].mxu0
        %v496 = vadd.f32 %v396, %v495
        %497 = vdwg.mxu0
        %v498 = vld [vmem:[%s4] sm:$0xf]
        %v499 = vld [vmem:[%s4 + $0x4] sm:$0xf]
        %v502 = vunpack.c.l.b16 %v498
        %v503 = vunpack.c.l.b16 %v499
        %v504 = vpack.c.b16 %v503, %v502
        %vm505 = vcmask 130048
        %v507 = vsel %vm505, %v504, 0
        %v510 = vsel %vm505, %v368, 0
        %v513 = vsel %vm505, %v369, 0
        %v516 = vsel %vm505, %v370, 0
        %v519 = vsel %vm505, %v371, 0
        %v522 = vsel %vm505, %v372, 0
        %v525 = vsel %vm505, %v373, 0
        %v528 = vsel %vm505, %v374, 0
        %v531 = vsel %vm505, %v375, 0
        %v534 = vsel %vm505, %v376, 0
        %v537 = vsel %vm505, %v377, 0
        %v540 = vsel %vm505, %v378, 0
        %v543 = vsel %vm505, %v379, 0
        %v546 = vsel %vm505, %v380, 0
        %v549 = vsel %vm505, %v381, 0
        %v552 = vsel %vm505, %v382, 0
        %v555 = vsel %vm505, %v383, 0
        %557 = vmatprep.subr.bf16.mxu0 0
        %558 = vmatpush1.bf16.xpose.msra.mxu0 %v510
        %559 = vmatprep.subr.bf16.mxu0 0
        %560 = vmatpush1.bf16.xpose.msra.mxu0 %v513
        %561 = vmatprep.subr.bf16.mxu0 0
        %562 = vmatpush1.bf16.xpose.msra.mxu0 %v516
        %563 = vmatprep.subr.bf16.mxu0 0
        %564 = vmatpush1.bf16.xpose.msra.mxu0 %v519
        %565 = vmatprep.subr.bf16.mxu0 0
        %566 = vmatpush1.bf16.xpose.msra.mxu0 %v522
        %567 = vmatprep.subr.bf16.mxu0 0
        %568 = vmatpush1.bf16.xpose.msra.mxu0 %v525
        %569 = vmatprep.subr.bf16.mxu0 0
        %570 = vmatpush1.bf16.xpose.msra.mxu0 %v528
        %571 = vmatprep.subr.bf16.mxu0 0
        %572 = vmatpush1.bf16.xpose.msra.mxu0 %v531
        %573 = vmatprep.subr.bf16.mxu0 0
        %574 = vmatpush1.bf16.xpose.msra.mxu0 %v534
        %575 = vmatprep.subr.bf16.mxu0 0
        %576 = vmatpush1.bf16.xpose.msra.mxu0 %v537
        %577 = vmatprep.subr.bf16.mxu0 0
        %578 = vmatpush1.bf16.xpose.msra.mxu0 %v540
        %579 = vmatprep.subr.bf16.mxu0 0
        %580 = vmatpush1.bf16.xpose.msra.mxu0 %v543
        %581 = vmatprep.subr.bf16.mxu0 0
        %582 = vmatpush1.bf16.xpose.msra.mxu0 %v546
        %583 = vmatprep.subr.bf16.mxu0 0
        %584 = vmatpush1.bf16.xpose.msra.mxu0 %v549
        %585 = vmatprep.subr.bf16.mxu0 0
        %586 = vmatpush1.bf16.xpose.msra.mxu0 %v552
        %587 = vmatprep.subr.bf16.mxu0 0
        %588 = vmatpush1.bf16.xpose.msra.mxu0 %v555
        %589 = vmatprep.mubr.bf16.mxu0 0
        %590 = vmatmul.mubr.bf16.gmra.mrb[0].mxu0 %v507
        %v591 = vpop.f32.mrb[0].mxu0
        %v592 = vadd.f32 0.0, %v591
        %v593 = vpop.f32.mrb[0].mxu0
        %v594 = vadd.f32 0.0, %v593
        %v595 = vpop.f32.mrb[0].mxu0
        %v596 = vadd.f32 0.0, %v595
        %v597 = vpop.f32.mrb[0].mxu0
        %v598 = vadd.f32 0.0, %v597
        %599 = vdwg.mxu0
        %vm600 = vcmp.gt.f32.partialorder %v592, 0.0
        %vm601 = vcmp.gt.f32.partialorder %v594, 0.0
        %vm602 = vcmp.gt.f32.partialorder %v596, 0.0
        %vm603 = vcmp.gt.f32.partialorder %v598, 0.0
        %v604 = vsel %vm600, %v490, -1e+10
        %v605 = vsel %vm601, %v492, -1e+10
        %v606 = vsel %vm602, %v494, -1e+10
        %v607 = vsel %vm603, %v496, -1e+10
        %v608 = vmax.f32 %v604, %v606
        %v609 = vrot.slane %v608, 4
        %v610 = vmax.f32 %v608, %v609
        %v611 = vrot.slane %v610, 2
        %v612 = vmax.f32 %v610, %v611
        %v613 = vrot.slane %v612, 1
        %v614 = vmax.f32 %v612, %v613
        %v615 = vmax.f32 %v605, %v607
        %v616 = vrot.slane %v615, 4
        %v617 = vmax.f32 %v615, %v616
        %v618 = vrot.slane %v617, 2
        %v619 = vmax.f32 %v617, %v618
        %v620 = vrot.slane %v619, 1
        %v621 = vmax.f32 %v619, %v620
        %v622 = vlaneseq
        %v623 = vshrl.u32 %v622, 7
        %v624 = vadd.s32 %v623, 8
        %v625 = vcvt.s32.f32 %v623
        %v626 = vcvt.s32.f32 %v624
        %vm627 = vcmp.eq.f32.partialorder %v604, %v614
        %vm628 = vcmp.eq.f32.partialorder %v605, %v621
        %vm629 = vcmp.eq.f32.partialorder %v606, %v614
        %vm630 = vcmp.eq.f32.partialorder %v607, %v621
        %v631 = vsel %vm627, %v625, 16.0
        %v632 = vsel %vm628, %v625, 16.0
        %v633 = vsel %vm629, %v626, 16.0
        %v634 = vsel %vm630, %v626, 16.0
        %v635 = vmin.f32 %v631, %v633
        %v636 = vrot.slane %v635, 4
        %v637 = vmin.f32 %v635, %v636
        %v638 = vrot.slane %v637, 2
        %v639 = vmin.f32 %v637, %v638
        %v640 = vrot.slane %v639, 1
        %v641 = vmin.f32 %v639, %v640
        %v642 = vmin.f32 %v632, %v634
        %v643 = vrot.slane %v642, 4
        %v644 = vmin.f32 %v642, %v643
        %v645 = vrot.slane %v644, 2
        %v646 = vmin.f32 %v644, %v645
        %v647 = vrot.slane %v646, 1
        %v648 = vmin.f32 %v646, %v647
        %v649 = vsub.f32 %v604, %v614
        %v650 = vsub.f32 %v605, %v621
        %v651 = vsub.f32 %v606, %v614
        %v652 = vsub.f32 %v607, %v621
        %v653 = vmul.f32 %v649, 1.442695
        %v654 = vpow.pop %v653
        %v655 = vmul.f32 %v650, 1.442695
        %v656 = vpow.pop %v655
        %v657 = vmul.f32 %v651, 1.442695
        %v658 = vpow.pop %v657
        %v659 = vmul.f32 %v652, 1.442695
        %v660 = vpow.pop %v659
        %v661 = vadd.f32 %v654, %v658
        %v662 = vrot.slane %v661, 4
        %v663 = vadd.f32 %v661, %v662
        %v664 = vrot.slane %v663, 2
        %v665 = vadd.f32 %v663, %v664
        %v666 = vrot.slane %v665, 1
        %v667 = vadd.f32 %v665, %v666
        %v668 = vadd.f32 %v656, %v660
        %v669 = vrot.slane %v668, 4
        %v670 = vadd.f32 %v668, %v669
        %v671 = vrot.slane %v670, 2
        %v672 = vadd.f32 %v670, %v671
        %v673 = vrot.slane %v672, 1
        %v674 = vadd.f32 %v672, %v673
        %v675 = vlog2.pop %v667
        %v676 = vmul.f32 %v675, 0.6931472
        %v677 = vlog2.pop %v674
        %v678 = vmul.f32 %v677, 0.6931472
        %v679 = vcvt.f32.s32.to.zero.pseudo %v641
        %v680 = vcvt.f32.s32.to.zero.pseudo %v648
        %v681 = vcombine.low %v679, %v680
        %v683 = vunpack.c.l.s4 1966171168
        %v684 = vunpack.c.0.s8 %v683
        %v685 = vlaneseq
        %v686 = vshrl.u32 %v685, 7
        %v687 = vsub.s32 %v684, %v686
        %v688 = vrot.slane %v681, %v687
        %v690 = vunpack.c.l.s4 1966171168
        %v691 = vunpack.c.0.s8 %v690
        %v692 = vlaneseq
        %v693 = vshrl.u32 %v692, 7
        %v694 = vsub.s32 %v691, %v693
        %v695 = vrot.slane %v688, %v694
        %v696 = vlaneseq
        %vm697 = vcmp.ge.s32.totalorder %v696, 0
        %vm698 = vcmp.lt.s32.totalorder %v696, 256
        %vm699 = vmand %vm697, %vm698
        %700 = vst.msk [vmem:[%s265] sm:$0x3] %vm699, %v695
        %v701 = vsub.f32 0.0, %v676
        %v702 = vsub.f32 0.0, %v678
        %v705 = vcombine.low %v701, %v702
        %v707 = vunpack.c.l.s4 1966171168
        %v708 = vunpack.c.0.s8 %v707
        %v709 = vlaneseq
        %v710 = vshrl.u32 %v709, 7
        %v711 = vsub.s32 %v708, %v710
        %v712 = vrot.slane %v705, %v711
        %v714 = vunpack.c.l.s4 1966171168
        %v715 = vunpack.c.0.s8 %v714
        %v716 = vlaneseq
        %v717 = vshrl.u32 %v716, 7
        %v718 = vsub.s32 %v715, %v717
        %v719 = vrot.slane %v712, %v718
        %721 = vst.msk [vmem:[%s272] sm:$0x3] %vm699, %v719
        %s722 = sand.u32 %s147, 1
        %s723 = scalar_lea.sflag [#allocation3], %s722
        %s724 = sand.u32 %s147, 1
        %s725 = smul.addr %s724, 2
        %s726 = scalar_lea.vmem [#allocation2], %s725
        %s727 = sand.u32 %s173, 1
        %s728 = scalar_lea.sflag [#allocation5], %s727
        %s729 = sand.u32 %s173, 1
        %s730 = smul.addr %s729, 2
        %s731 = scalar_lea.vmem [#allocation4], %s730
        // Predicated region
        $region41: #{tpu_custom_call.1} parent=39 // pred_check
          %p732 = pneg %p157
        $region42: #{tpu_custom_call.1} parent=39 // pred_check_branch
          %734 = sbr.rel (%p732) target = $region44
        $region43: #{tpu_custom_call.1} parent=39 // pred_region
          %s735 = smul.u32 2, %s24
          %s737 = ssub.s32 32, 32
          %738 = vsyncadd %s723, %s737
          %s739 = smul.addr %s735, 16
          %s740 = scalar_lea.hbm %s5, %s739
          %s742 = sshll.u32 %s726, 4
          %s743 = int_to_ptr.vmem [resolvable:$true] %s742
          %745 = dma.vmem_to_hbm [thread:$0]  %s743, 32, %s740, %s723
        $region44: #{tpu_custom_call.1} parent=39 // pred_fallthru
          _
        // Predicated region
        $region45: #{tpu_custom_call.1} parent=39 // pred_check
          %p746 = pneg %p183
        $region46: #{tpu_custom_call.1} parent=39 // pred_check_branch
          %748 = sbr.rel (%p746) target = $region48
        $region47: #{tpu_custom_call.1} parent=39 // pred_region
          %s749 = smul.u32 2, %s24
          %s751 = ssub.s32 32, 32
          %752 = vsyncadd %s728, %s751
          %s753 = smul.addr %s749, 16
          %s754 = scalar_lea.hbm %s6, %s753
          %s756 = sshll.u32 %s731, 4
          %s757 = int_to_ptr.vmem [resolvable:$true] %s756
          %759 = dma.vmem_to_hbm [thread:$0]  %s757, 32, %s754, %s728
        $region48: #{tpu_custom_call.1} parent=39 // pred_fallthru
          _
      $region40: #{tpu_custom_call.1} parent=5 // pred_fallthru
        _
      %p760 = scmp.le.s32.totalorder 2, %s19
      // Predicated region
      $region49: #{tpu_custom_call.1} parent=5 // pred_check
        %p761 = pneg %p760
      $region50: #{tpu_custom_call.1} parent=5 // pred_check_branch
        %763 = sbr.rel (%p761) target = $region52
      $region51: #{tpu_custom_call.1} parent=5 // pred_region
        %s764 = ssub.s32 %s19, 2
        // Predicated region
        $region53: #{tpu_custom_call.1} parent=51 // pred_check
          %p765 = pneg %p163
        $region54: #{tpu_custom_call.1} parent=51 // pred_check_branch
          %767 = sbr.rel (%p765) target = $region56
        $region55: #{tpu_custom_call.1} parent=51 // pred_region
          %s768 = sand.u32 %s148, 1
          %s769 = scalar_lea.sflag [#allocation3], %s768
          %s770 = sand.u32 %s148, 1
          %s771 = smul.addr %s770, 2
          %s772 = scalar_lea.vmem [#allocation2], %s771
          %773 = dma.done %s769, 32
        $region56: #{tpu_custom_call.1} parent=51 // pred_fallthru
          _
        // Predicated region
        $region57: #{tpu_custom_call.1} parent=51 // pred_check
          %p774 = pneg %p189
        $region58: #{tpu_custom_call.1} parent=51 // pred_check_branch
          %776 = sbr.rel (%p774) target = $region60
        $region59: #{tpu_custom_call.1} parent=51 // pred_region
          %s777 = sand.u32 %s174, 1
          %s778 = scalar_lea.sflag [#allocation5], %s777
          %s779 = sand.u32 %s174, 1
          %s780 = smul.addr %s779, 2
          %s781 = scalar_lea.vmem [#allocation4], %s780
          %782 = dma.done %s778, 32
        $region60: #{tpu_custom_call.1} parent=51 // pred_fallthru
          _
      $region52: #{tpu_custom_call.1} parent=5 // pred_fallthru
        _
    $region6: #{tpu_custom_call.1} parent=1 // loop_footer
      %s23 = sadd.s32 1, %s19
    $region7: #{tpu_custom_call.1} parent=1 // loop_footer_branch
      %18 = sbr.rel target = $region3
    $region8: #{tpu_custom_call.1} parent=1 // loop_exit
      _
    %783 = vsyncpa [#allocation3], 1
    %s784 = scalar_lea.sflag [#allocation3], 1
    %785 = vsyncpa %s784, 1
    %786 = vsyncpa [#allocation5], 1
    %s787 = scalar_lea.sflag [#allocation5], 1
    %788 = vsyncpa %s787, 1

</llo_original>
